<compile_context>
chip_gen: v5e
topology: v5e:2x2
jax: 0.10.0
libtpu: 0.0.40
codegen_flags: <defaults>
</compile_context>

<pallas_src>
import functools

import jax
import jax.numpy as jnp
from jax.experimental import pallas as pl
from jax.experimental.pallas import tpu as pltpu


def _spacenet_kernel(*refs, B, T, whh_is_identity):
    if whh_is_identity:
        x2d_ref, w1_ref, b1_ref, w2_ref, b2_ref, wih_ref, corr_ref, p_ref = refs
        whh_ref = None
    else:
        x2d_ref, w1_ref, b1_ref, w2_ref, b2_ref, wih_ref, whh_ref, corr_ref, p_ref = refs

    f32 = jnp.float32
    n_out = wih_ref.shape[1]

    # ---- p0 initial-state MLP on an all-ones (B, S0) input.
    # ones @ W1 is just the column-sum of W1 (broadcast over batch), so the first
    # Linear needs no matmul at all.
    z1 = jnp.maximum(jnp.sum(w1_ref[...], axis=0, keepdims=True) + b1_ref[...], 0.0)   # (1, 64)
    h0 = jnp.maximum(
        jnp.dot(z1, w2_ref[...], preferred_element_type=f32) + b2_ref[...], 0.0)       # (1, n_out)
    h = jnp.broadcast_to(h0, (B, n_out))                                               # (B, n_out)

    # ---- Input projection hoisted out of the recurrence:
    # one (T*B, n_in) @ (n_in, n_out) matmul instead of T tiny serialized ones.
    # Row t*B + b of x2d holds x[b, t, :].
    x_proj = jnp.dot(x2d_ref[...], wih_ref[...], preferred_element_type=f32)           # (T*B, n_out)

    # ---- ReLU RNN recurrence, no bias. Hidden states stay in registers.
    hs = []
    for t in range(T):
        xt = x_proj[t * B:(t + 1) * B, :]                      # (B, n_out), static slice
        if whh_is_identity:
            pre = xt + h                                       # weight_hh == I  -> pure VPU
        else:
            pre = xt + jnp.dot(h, whh_ref[...], preferred_element_type=f32)
        h = jnp.maximum(pre, 0.0)
        hs.append(h)

    # ---- Single lane-dense store of all hidden states: (B, T*n_out).
    p_ref[...] = jnp.concatenate(hs, axis=-1)

    # ---- corr = exp(-||p_i - p_j||^2), per batch, via the clamped Gram formulation.
    # ||p_i||^2 is read off the diagonal of the Gram matrix with masked reductions,
    # avoiding any lane<->sublane transpose.
    eye = (jax.lax.broadcasted_iota(jnp.int32, (T, T), 0)
           == jax.lax.broadcasted_iota(jnp.int32, (T, T), 1)).astype(f32)
    for b in range(B):
        pb = jnp.concatenate([hs[t][b:b + 1, :] for t in range(T)], axis=0)            # (T, n_out)
        g = jax.lax.dot_general(pb, pb, (((1,), (1,)), ((), ())),
                                preferred_element_type=f32)                            # (T, T) = p p^T
        diag = g * eye
        sq_col = jnp.sum(diag, axis=1, keepdims=True)          # (T, 1): ||p_i||^2
        sq_row = jnp.sum(diag, axis=0, keepdims=True)          # (1, T): ||p_j||^2
        dp = jnp.maximum(sq_col + sq_row - 2.0 * g, 0.0)       # clamp tiny negative cancellation
        corr_ref[b, :, :] = jnp.exp(-dp)

    # TODO(synk): corr_across_space=True path (torch pdist on flattened (B*T, n_out))
    # is not implemented; the default config (corr_across_space=False) is reproduced.


def recurrent_spacenet_forward(x, w1t, b1, w2t, b2, wih_t, whh_t=None, *,
                               whh_is_identity=True):
    """RecurrentSpaceNet forward. Returns (corr, p, new_hidden_state)."""
    B, T, n_in = x.shape
    n_out = wih_t.shape[1]

    # Time-major 2-D view of the input so the kernel does the whole x @ W_ih
    # projection as a single matmul (pure layout plumbing, done once in XLA).
    x2d = jnp.transpose(x, (1, 0, 2)).reshape(T * B, n_in)

    vmem = pl.BlockSpec(memory_space=pltpu.MemorySpace.VMEM)
    args = [x2d, w1t, b1, w2t, b2, wih_t]
    if not whh_is_identity:
        if whh_t is None:
            raise ValueError("whh_t must be provided when whh_is_identity=False")
        args.append(whh_t)

    kernel = functools.partial(_spacenet_kernel, B=B, T=T,
                               whh_is_identity=whh_is_identity)

    corr, p_flat = pl.pallas_call(
        kernel,
        out_shape=(
            jax.ShapeDtypeStruct((B, T, T), jnp.float32),      # corr
            jax.ShapeDtypeStruct((B, T * n_out), jnp.float32),  # p, lane-dense slab
        ),
        in_specs=[vmem] * len(args),
        out_specs=(vmem, vmem),
    )(*args)

    p = p_flat.reshape(B, T, n_out)
    # Single-layer RNN: new hidden state == last output step, in PyTorch's
    # (num_layers, B, n_out) convention.
    new_hidden_state = p[:, -1, :][None, :, :]
    return corr, p, new_hidden_state


def _reference(x, w1t, b1, w2t, b2, wih_t, whh_t):
    B, T, _ = x.shape
    ones = jnp.ones((B, w1t.shape[0]), jnp.float32)
    z1 = jax.nn.relu(ones @ w1t + b1)
    h = jax.nn.relu(z1 @ w2t + b2)
    hs = []
    for t in range(T):
        h = jax.nn.relu(x[:, t, :] @ wih_t + h @ whh_t)
        hs.append(h)
    p = jnp.stack(hs, axis=1)
    diff = p[:, :, None, :] - p[:, None, :, :]
    corr = jnp.exp(-jnp.sum(diff * diff, axis=-1))
    return corr, p, h[None, :, :]


if __name__ == "__main__":
    # Small shapes consistent with the module's forward.
    B, T = 2, 8
    n_in, n_out = 3, 32
    initial_state_size = 2
    hidden_mlp = 64

    key = jax.random.PRNGKey(0)
    k_x, k_w1, k_b1, k_w2, k_b2, k_wih, k_whh = jax.random.split(key, 7)

    x = jax.random.normal(k_x, (B, T, n_in), dtype=jnp.float32)

    def unif(k, shape, fan_in):
        bound = 1.0 / jnp.sqrt(jnp.float32(fan_in))
        return jax.random.uniform(k, shape, jnp.float32, -bound, bound)

    w1t = unif(k_w1, (initial_state_size, hidden_mlp), initial_state_size)  # Linear(S0,64)^T
    b1 = unif(k_b1, (1, hidden_mlp), initial_state_size)
    w2t = unif(k_w2, (hidden_mlp, n_out), hidden_mlp)                        # Linear(64,n_out)^T
    b2 = unif(k_b2, (1, n_out), hidden_mlp)
    wih_t = unif(k_wih, (n_in, n_out), n_out)                                # RNN weight_ih_l0^T
    whh_eye = jnp.eye(n_out, dtype=jnp.float32)                              # torch.nn.init.eye_

    # --- identity weight_hh fast path (matches the module at init) ---
    corr, p, h_new = recurrent_spacenet_forward(
        x, w1t, b1, w2t, b2, wih_t, whh_eye, whh_is_identity=True)
    jax.block_until_ready((corr, p, h_new))

    corr_r, p_r, h_r = _reference(x, w1t, b1, w2t, b2, wih_t, whh_eye)
    assert corr.shape == (B, T, T) and p.shape == (B, T, n_out) and h_new.shape == (1, B, n_out)
    assert jnp.allclose(corr, corr_r, atol=1e-4), "corr mismatch (identity whh)"
    assert jnp.allclose(p, p_r, atol=1e-4), "p mismatch (identity whh)"
    assert jnp.allclose(h_new, h_r, atol=1e-4), "hidden state mismatch (identity whh)"

    # --- general weight_hh path (e.g. after training) ---
    whh_gen = whh_eye + 0.05 * unif(k_whh, (n_out, n_out), n_out)
    corr_g, p_g, h_g = recurrent_spacenet_forward(
        x, w1t, b1, w2t, b2, wih_t, whh_gen, whh_is_identity=False)
    jax.block_until_ready((corr_g, p_g, h_g))

    corr_gr, p_gr, h_gr = _reference(x, w1t, b1, w2t, b2, wih_t, whh_gen)
    assert jnp.allclose(corr_g, corr_gr, atol=1e-4), "corr mismatch (general whh)"
    assert jnp.allclose(p_g, p_gr, atol=1e-4), "p mismatch (general whh)"
    assert jnp.allclose(h_g, h_gr, atol=1e-4), "hidden state mismatch (general whh)"

    print("KERNEL_OK")
</pallas_src>

<mosaic_0001>
module attributes {stable_mosaic.version = 11 : i64} {
  func.func @_spacenet_kernel(%arg0: memref<16x3xf32, #tpu.memory_space<vmem>>, %arg1: memref<2x64xf32, #tpu.memory_space<vmem>>, %arg2: memref<1x64xf32, #tpu.memory_space<vmem>>, %arg3: memref<64x32xf32, #tpu.memory_space<vmem>>, %arg4: memref<1x32xf32, #tpu.memory_space<vmem>>, %arg5: memref<3x32xf32, #tpu.memory_space<vmem>>, %arg6: memref<2x8x8xf32, #tpu.memory_space<vmem>>, %arg7: memref<2x256xf32, #tpu.memory_space<vmem>>) attributes {dimension_semantics = [], scalar_prefetch = 0 : i64, scratch_operands = 0 : i64, tpu.core_type = #tpu.core_type<tc>} {
    %c0 = arith.constant 0 : index
    %c0_0 = arith.constant 0 : index
    %0 = vector.load %arg1[%c0, %c0_0] : memref<2x64xf32, #tpu.memory_space<vmem>>, vector<2x64xf32>
    %cst = arith.constant dense<0.000000e+00> : vector<64xf32>
    %1 = vector.multi_reduction <add>, %0, %cst [0] : vector<2x64xf32> to vector<64xf32>
    %2 = vector.shape_cast %1 : vector<64xf32> to vector<1x64xf32>
    %c0_1 = arith.constant 0 : index
    %c0_2 = arith.constant 0 : index
    %3 = vector.load %arg2[%c0_1, %c0_2] : memref<1x64xf32, #tpu.memory_space<vmem>>, vector<1x64xf32>
    %4 = arith.addf %2, %3 : vector<1x64xf32>
    %cst_3 = arith.constant 0.000000e+00 : f32
    %5 = vector.broadcast %cst_3 : f32 to vector<1x64xf32>
    %6 = arith.maximumf %4, %5 : vector<1x64xf32>
    %c0_4 = arith.constant 0 : index
    %c0_5 = arith.constant 0 : index
    %7 = vector.load %arg3[%c0_4, %c0_5] : memref<64x32xf32, #tpu.memory_space<vmem>>, vector<64x32xf32>
    %cst_6 = arith.constant dense<0.000000e+00> : vector<1x32xf32>
    %8 = tpu.matmul %6, %7, %cst_6 {dimension_numbers = #tpu.dot_dimension_numbers<[1], [0], [0], [1], [0, 0, 1, 1], [], []>} : vector<1x64xf32>, vector<64x32xf32>, vector<1x32xf32> -> vector<1x32xf32>
    %c0_7 = arith.constant 0 : index
    %c0_8 = arith.constant 0 : index
    %9 = vector.load %arg4[%c0_7, %c0_8] : memref<1x32xf32, #tpu.memory_space<vmem>>, vector<1x32xf32>
    %10 = arith.addf %8, %9 : vector<1x32xf32>
    %cst_9 = arith.constant 0.000000e+00 : f32
    %11 = vector.broadcast %cst_9 : f32 to vector<1x32xf32>
    %12 = arith.maximumf %10, %11 : vector<1x32xf32>
    %13 = vector.shape_cast %12 : vector<1x32xf32> to vector<1x32xf32>
    %14 = vector.broadcast %13 : vector<1x32xf32> to vector<2x32xf32>
    %c0_10 = arith.constant 0 : index
    %c0_11 = arith.constant 0 : index
    %15 = vector.load %arg0[%c0_10, %c0_11] : memref<16x3xf32, #tpu.memory_space<vmem>>, vector<16x3xf32>
    %c0_12 = arith.constant 0 : index
    %c0_13 = arith.constant 0 : index
    %16 = vector.load %arg5[%c0_12, %c0_13] : memref<3x32xf32, #tpu.memory_space<vmem>>, vector<3x32xf32>
    %cst_14 = arith.constant dense<0.000000e+00> : vector<16x32xf32>
    %17 = tpu.matmul %15, %16, %cst_14 {dimension_numbers = #tpu.dot_dimension_numbers<[1], [0], [0], [1], [0, 0, 1, 1], [], []>} : vector<16x3xf32>, vector<3x32xf32>, vector<16x32xf32> -> vector<16x32xf32>
    %18 = vector.extract_strided_slice %17 {offsets = [0, 0], sizes = [2, 32], strides = [1, 1]} : vector<16x32xf32> to vector<2x32xf32>
    %19 = arith.addf %18, %14 : vector<2x32xf32>
    %cst_15 = arith.constant 0.000000e+00 : f32
    %20 = vector.broadcast %cst_15 : f32 to vector<2x32xf32>
    %21 = arith.maximumf %19, %20 : vector<2x32xf32>
    %22 = vector.extract_strided_slice %17 {offsets = [2, 0], sizes = [2, 32], strides = [1, 1]} : vector<16x32xf32> to vector<2x32xf32>
    %23 = arith.addf %22, %21 : vector<2x32xf32>
    %cst_16 = arith.constant 0.000000e+00 : f32
    %24 = vector.broadcast %cst_16 : f32 to vector<2x32xf32>
    %25 = arith.maximumf %23, %24 : vector<2x32xf32>
    %26 = vector.extract_strided_slice %17 {offsets = [4, 0], sizes = [2, 32], strides = [1, 1]} : vector<16x32xf32> to vector<2x32xf32>
    %27 = arith.addf %26, %25 : vector<2x32xf32>
    %cst_17 = arith.constant 0.000000e+00 : f32
    %28 = vector.broadcast %cst_17 : f32 to vector<2x32xf32>
    %29 = arith.maximumf %27, %28 : vector<2x32xf32>
    %30 = vector.extract_strided_slice %17 {offsets = [6, 0], sizes = [2, 32], strides = [1, 1]} : vector<16x32xf32> to vector<2x32xf32>
    %31 = arith.addf %30, %29 : vector<2x32xf32>
    %cst_18 = arith.constant 0.000000e+00 : f32
    %32 = vector.broadcast %cst_18 : f32 to vector<2x32xf32>
    %33 = arith.maximumf %31, %32 : vector<2x32xf32>
    %34 = vector.extract_strided_slice %17 {offsets = [8, 0], sizes = [2, 32], strides = [1, 1]} : vector<16x32xf32> to vector<2x32xf32>
    %35 = arith.addf %34, %33 : vector<2x32xf32>
    %cst_19 = arith.constant 0.000000e+00 : f32
    %36 = vector.broadcast %cst_19 : f32 to vector<2x32xf32>
    %37 = arith.maximumf %35, %36 : vector<2x32xf32>
    %38 = vector.extract_strided_slice %17 {offsets = [10, 0], sizes = [2, 32], strides = [1, 1]} : vector<16x32xf32> to vector<2x32xf32>
    %39 = arith.addf %38, %37 : vector<2x32xf32>
    %cst_20 = arith.constant 0.000000e+00 : f32
    %40 = vector.broadcast %cst_20 : f32 to vector<2x32xf32>
    %41 = arith.maximumf %39, %40 : vector<2x32xf32>
    %42 = vector.extract_strided_slice %17 {offsets = [12, 0], sizes = [2, 32], strides = [1, 1]} : vector<16x32xf32> to vector<2x32xf32>
    %43 = arith.addf %42, %41 : vector<2x32xf32>
    %cst_21 = arith.constant 0.000000e+00 : f32
    %44 = vector.broadcast %cst_21 : f32 to vector<2x32xf32>
    %45 = arith.maximumf %43, %44 : vector<2x32xf32>
    %46 = vector.extract_strided_slice %17 {offsets = [14, 0], sizes = [2, 32], strides = [1, 1]} : vector<16x32xf32> to vector<2x32xf32>
    %47 = arith.addf %46, %45 : vector<2x32xf32>
    %cst_22 = arith.constant 0.000000e+00 : f32
    %48 = vector.broadcast %cst_22 : f32 to vector<2x32xf32>
    %49 = arith.maximumf %47, %48 : vector<2x32xf32>
    %50 = tpu.concatenate %21, %25, %29, %33, %37, %41, %45, %49 in 1 : vector<2x32xf32>, vector<2x32xf32>, vector<2x32xf32>, vector<2x32xf32>, vector<2x32xf32>, vector<2x32xf32>, vector<2x32xf32>, vector<2x32xf32> -> vector<2x256xf32>
    %c0_23 = arith.constant 0 : index
    %c0_24 = arith.constant 0 : index
    %51 = vector.load %arg7[%c0_23, %c0_24] : memref<2x256xf32, #tpu.memory_space<vmem>>, vector<2x256xf32>
    tpu.vector_store %arg7[%c0_23, %c0_24], %50 {strides = array<i32>} : memref<2x256xf32, #tpu.memory_space<vmem>>, vector<2x256xf32>,
    %52 = tpu.iota {dimensions = array<i32: 0>} : vector<8x8xi32>
    %53 = tpu.iota {dimensions = array<i32: 1>} : vector<8x8xi32>
    %54 = arith.cmpi eq, %52, %53 : vector<8x8xi32>
    %55 = arith.extui %54 : vector<8x8xi1> to vector<8x8xi32>
    %56 = arith.sitofp %55 : vector<8x8xi32> to vector<8x8xf32>
    %57 = vector.extract_strided_slice %21 {offsets = [0, 0], sizes = [1, 32], strides = [1, 1]} : vector<2x32xf32> to vector<1x32xf32>
    %58 = vector.extract_strided_slice %25 {offsets = [0, 0], sizes = [1, 32], strides = [1, 1]} : vector<2x32xf32> to vector<1x32xf32>
    %59 = vector.extract_strided_slice %29 {offsets = [0, 0], sizes = [1, 32], strides = [1, 1]} : vector<2x32xf32> to vector<1x32xf32>
    %60 = vector.extract_strided_slice %33 {offsets = [0, 0], sizes = [1, 32], strides = [1, 1]} : vector<2x32xf32> to vector<1x32xf32>
    %61 = vector.extract_strided_slice %37 {offsets = [0, 0], sizes = [1, 32], strides = [1, 1]} : vector<2x32xf32> to vector<1x32xf32>
    %62 = vector.extract_strided_slice %41 {offsets = [0, 0], sizes = [1, 32], strides = [1, 1]} : vector<2x32xf32> to vector<1x32xf32>
    %63 = vector.extract_strided_slice %45 {offsets = [0, 0], sizes = [1, 32], strides = [1, 1]} : vector<2x32xf32> to vector<1x32xf32>
    %64 = vector.extract_strided_slice %49 {offsets = [0, 0], sizes = [1, 32], strides = [1, 1]} : vector<2x32xf32> to vector<1x32xf32>
    %65 = tpu.concatenate %57, %58, %59, %60, %61, %62, %63, %64 in 0 : vector<1x32xf32>, vector<1x32xf32>, vector<1x32xf32>, vector<1x32xf32>, vector<1x32xf32>, vector<1x32xf32>, vector<1x32xf32>, vector<1x32xf32> -> vector<8x32xf32>
    %cst_25 = arith.constant dense<0.000000e+00> : vector<8x8xf32>
    %66 = tpu.matmul %65, %65, %cst_25 {dimension_numbers = #tpu.dot_dimension_numbers<[1], [1], [0], [0], [0, 0, 1, 0], [], []>} : vector<8x32xf32>, vector<8x32xf32>, vector<8x8xf32> -> vector<8x8xf32>
    %67 = arith.mulf %66, %56 : vector<8x8xf32>
    %cst_26 = arith.constant dense<0.000000e+00> : vector<8xf32>
    %68 = vector.multi_reduction <add>, %67, %cst_26 [1] : vector<8x8xf32> to vector<8xf32>
    %69 = vector.shape_cast %68 : vector<8xf32> to vector<8x1xf32>
    %cst_27 = arith.constant dense<0.000000e+00> : vector<8xf32>
    %70 = vector.multi_reduction <add>, %67, %cst_27 [0] : vector<8x8xf32> to vector<8xf32>
    %71 = vector.shape_cast %70 : vector<8xf32> to vector<1x8xf32>
    %72 = vector.broadcast %69 : vector<8x1xf32> to vector<8x8xf32>
    %73 = vector.broadcast %71 : vector<1x8xf32> to vector<8x8xf32>
    %74 = arith.addf %72, %73 : vector<8x8xf32>
    %cst_28 = arith.constant 2.000000e+00 : f32
    %75 = vector.broadcast %cst_28 : f32 to vector<8x8xf32>
    %76 = arith.mulf %75, %66 : vector<8x8xf32>
    %77 = arith.subf %74, %76 : vector<8x8xf32>
    %cst_29 = arith.constant 0.000000e+00 : f32
    %78 = vector.broadcast %cst_29 : f32 to vector<8x8xf32>
    %79 = arith.maximumf %77, %78 : vector<8x8xf32>
    %cst_30 = arith.constant 0.000000e+00 : f32
    %80 = vector.broadcast %cst_30 : f32 to vector<8x8xf32>
    %81 = arith.subf %80, %79 : vector<8x8xf32>
    %82 = math.exp %81 : vector<8x8xf32>
    %c0_31 = arith.constant 0 : index
    %c0_32 = arith.constant 0 : index
    %c0_33 = arith.constant 0 : index
    %83 = vector.load %arg6[%c0_31, %c0_32, %c0_33] : memref<2x8x8xf32, #tpu.memory_space<vmem>>, vector<1x8x8xf32>
    %84 = vector.shape_cast %83 : vector<1x8x8xf32> to vector<8x8xf32>
    %85 = vector.shape_cast %82 : vector<8x8xf32> to vector<1x8x8xf32>
    tpu.vector_store %arg6[%c0_31, %c0_32, %c0_33], %85 {strides = array<i32>} : memref<2x8x8xf32, #tpu.memory_space<vmem>>, vector<1x8x8xf32>,
    %86 = vector.extract_strided_slice %21 {offsets = [1, 0], sizes = [1, 32], strides = [1, 1]} : vector<2x32xf32> to vector<1x32xf32>
    %87 = vector.extract_strided_slice %25 {offsets = [1, 0], sizes = [1, 32], strides = [1, 1]} : vector<2x32xf32> to vector<1x32xf32>
    %88 = vector.extract_strided_slice %29 {offsets = [1, 0], sizes = [1, 32], strides = [1, 1]} : vector<2x32xf32> to vector<1x32xf32>
    %89 = vector.extract_strided_slice %33 {offsets = [1, 0], sizes = [1, 32], strides = [1, 1]} : vector<2x32xf32> to vector<1x32xf32>
    %90 = vector.extract_strided_slice %37 {offsets = [1, 0], sizes = [1, 32], strides = [1, 1]} : vector<2x32xf32> to vector<1x32xf32>
    %91 = vector.extract_strided_slice %41 {offsets = [1, 0], sizes = [1, 32], strides = [1, 1]} : vector<2x32xf32> to vector<1x32xf32>
    %92 = vector.extract_strided_slice %45 {offsets = [1, 0], sizes = [1, 32], strides = [1, 1]} : vector<2x32xf32> to vector<1x32xf32>
    %93 = vector.extract_strided_slice %49 {offsets = [1, 0], sizes = [1, 32], strides = [1, 1]} : vector<2x32xf32> to vector<1x32xf32>
    %94 = tpu.concatenate %86, %87, %88, %89, %90, %91, %92, %93 in 0 : vector<1x32xf32>, vector<1x32xf32>, vector<1x32xf32>, vector<1x32xf32>, vector<1x32xf32>, vector<1x32xf32>, vector<1x32xf32>, vector<1x32xf32> -> vector<8x32xf32>
    %cst_34 = arith.constant dense<0.000000e+00> : vector<8x8xf32>
    %95 = tpu.matmul %94, %94, %cst_34 {dimension_numbers = #tpu.dot_dimension_numbers<[1], [1], [0], [0], [0, 0, 1, 0], [], []>} : vector<8x32xf32>, vector<8x32xf32>, vector<8x8xf32> -> vector<8x8xf32>
    %96 = arith.mulf %95, %56 : vector<8x8xf32>
    %cst_35 = arith.constant dense<0.000000e+00> : vector<8xf32>
    %97 = vector.multi_reduction <add>, %96, %cst_35 [1] : vector<8x8xf32> to vector<8xf32>
    %98 = vector.shape_cast %97 : vector<8xf32> to vector<8x1xf32>
    %cst_36 = arith.constant dense<0.000000e+00> : vector<8xf32>
    %99 = vector.multi_reduction <add>, %96, %cst_36 [0] : vector<8x8xf32> to vector<8xf32>
    %100 = vector.shape_cast %99 : vector<8xf32> to vector<1x8xf32>
    %101 = vector.broadcast %98 : vector<8x1xf32> to vector<8x8xf32>
    %102 = vector.broadcast %100 : vector<1x8xf32> to vector<8x8xf32>
    %103 = arith.addf %101, %102 : vector<8x8xf32>
    %cst_37 = arith.constant 2.000000e+00 : f32
    %104 = vector.broadcast %cst_37 : f32 to vector<8x8xf32>
    %105 = arith.mulf %104, %95 : vector<8x8xf32>
    %106 = arith.subf %103, %105 : vector<8x8xf32>
    %cst_38 = arith.constant 0.000000e+00 : f32
    %107 = vector.broadcast %cst_38 : f32 to vector<8x8xf32>
    %108 = arith.maximumf %106, %107 : vector<8x8xf32>
    %cst_39 = arith.constant 0.000000e+00 : f32
    %109 = vector.broadcast %cst_39 : f32 to vector<8x8xf32>
    %110 = arith.subf %109, %108 : vector<8x8xf32>
    %111 = math.exp %110 : vector<8x8xf32>
    %c1 = arith.constant 1 : index
    %c0_40 = arith.constant 0 : index
    %c0_41 = arith.constant 0 : index
    %112 = vector.load %arg6[%c1, %c0_40, %c0_41] : memref<2x8x8xf32, #tpu.memory_space<vmem>>, vector<1x8x8xf32>
    %113 = vector.shape_cast %112 : vector<1x8x8xf32> to vector<8x8xf32>
    %114 = vector.shape_cast %111 : vector<8x8xf32> to vector<1x8x8xf32>
    tpu.vector_store %arg6[%c1, %c0_40, %c0_41], %114 {strides = array<i32>} : memref<2x8x8xf32, #tpu.memory_space<vmem>>, vector<1x8x8xf32>,
    return
  }
}

</mosaic_0001>

<llo_original>
// kernel: tpu_custom_call.1
$region0: #{tpu_custom_call.1}
  #allocation0 [shape = 'u32[]', space=smem, size = 0x4, offset = 0x4, fixed_abs, tag = 'smem constant byte address 0x4 - core index']
  #allocation1 [shape = 'u32[72,128]{1,0:T(1,128)}', space=vmem, size = 0x9000, scoped, tag = 'internal scratch']
  %s0 = inlined_call_operand.vmem [shape: f32[16,3], index: 0, kind: input, shape index: {}]
  %s1 = inlined_call_operand.vmem [shape: f32[2,64], index: 1, kind: input, shape index: {}]
  %s2 = inlined_call_operand.vmem [shape: f32[1,64], index: 2, kind: input, shape index: {}]
  %s3 = inlined_call_operand.vmem [shape: f32[64,32], index: 3, kind: input, shape index: {}]
  %s4 = inlined_call_operand.vmem [shape: f32[1,32], index: 4, kind: input, shape index: {}]
  %s5 = inlined_call_operand.vmem [shape: f32[3,32], index: 5, kind: input, shape index: {}]
  %s6 = inlined_call_operand.hbm [shape: f32[2,8,8], index: 6, kind: output, shape index: {0}]
  %s7 = inlined_call_operand.hbm [shape: f32[2,256], index: 7, kind: output, shape index: {1}]
  %8 = xla_tuple %s6, %s7
  %s9 = sld [smem:[#allocation0]]
  $region42: #{tpu_custom_call.1} parent=0
    _
  %s11 = ssub.s32 1, %s9
  %s12 = scalar_select 0, %s11, %s9
  $region1: #{tpu_custom_call.1} parent=0
    #allocation2 [shape = 'u8[8192]{0}', space=vmem, size = 0x2000, scoped, tag = 'output window, operand 0, single buffered']
    #allocation3 [shape = 's32[1]{0}', space=sflag, size = 0x4, scoped, tag = 'scoped memory for tpu_custom_call.1']
    #allocation4 [shape = 'u8[2048]{0}', space=vmem, size = 0x800, scoped, tag = 'output window, operand 1, single buffered']
    #allocation5 [shape = 's32[1]{0}', space=sflag, size = 0x4, scoped, tag = 'scoped memory for tpu_custom_call.1']
    %13 = vsyncpa [#allocation3], 0
    %14 = vsyncpa [#allocation5], 0
    // Predicated region
    $region2: #{tpu_custom_call.1} parent=1 // pred_check
      _
    $region3: #{tpu_custom_call.1} parent=1 // pred_check_branch
      %16 = sbr.rel (0) target = $region5
    $region4: #{tpu_custom_call.1} parent=1 // pred_region
      _
    $region5: #{tpu_custom_call.1} parent=1 // pred_fallthru
      _
    // Predicated region
    $region6: #{tpu_custom_call.1} parent=1 // pred_check
      _
    $region7: #{tpu_custom_call.1} parent=1 // pred_check_branch
      %18 = sbr.rel (0) target = $region9
    $region8: #{tpu_custom_call.1} parent=1 // pred_region
      _
    $region9: #{tpu_custom_call.1} parent=1 // pred_fallthru
      _
    // Predicated region
    $region10: #{tpu_custom_call.1} parent=1 // pred_check
      _
    $region11: #{tpu_custom_call.1} parent=1 // pred_check_branch
      %20 = sbr.rel (0) target = $region13
    $region12: #{tpu_custom_call.1} parent=1 // pred_region
      _
    $region13: #{tpu_custom_call.1} parent=1 // pred_fallthru
      _
    // Predicated region
    $region14: #{tpu_custom_call.1} parent=1 // pred_check
      _
    $region15: #{tpu_custom_call.1} parent=1 // pred_check_branch
      %22 = sbr.rel (0) target = $region17
    $region16: #{tpu_custom_call.1} parent=1 // pred_region
      _
    $region17: #{tpu_custom_call.1} parent=1 // pred_fallthru
      _
    // Predicated region
    $region18: #{tpu_custom_call.1} parent=1 // pred_check
      _
    $region19: #{tpu_custom_call.1} parent=1 // pred_check_branch
      %24 = sbr.rel (0) target = $region21
    $region20: #{tpu_custom_call.1} parent=1 // pred_region
      _
    $region21: #{tpu_custom_call.1} parent=1 // pred_fallthru
      _
    // Predicated region
    $region22: #{tpu_custom_call.1} parent=1 // pred_check
      _
    $region23: #{tpu_custom_call.1} parent=1 // pred_check_branch
      %26 = sbr.rel (0) target = $region25
    $region24: #{tpu_custom_call.1} parent=1 // pred_region
      _
    $region25: #{tpu_custom_call.1} parent=1 // pred_fallthru
      _
    %v27 = vld [vmem:[%s1] sm:$0x3]
    %vm28 = vcmask 517120
    %v29 = vsel %vm28, %v27, 0.0
    %v30 = vrot.slane %v29, 4
    %v31 = vadd.f32 %v29, %v30
    %v32 = vrot.slane %v31, 2
    %v33 = vadd.f32 %v31, %v32
    %v34 = vrot.slane %v33, 1
    %v35 = vadd.f32 %v33, %v34
    %v36 = vld [vmem:[%s2] sm:$0x1]
    %v37 = vadd.f32 %v35, %v36
    %v38 = vmax.f32 %v37, 0.0
    %v39 = vld [vmem:[%s3] sm:$0xff]
    %v40 = vld [vmem:[%s3 + $0x8] sm:$0xff]
    %v41 = vld [vmem:[%s3 + $0x10] sm:$0xff]
    %v42 = vld [vmem:[%s3 + $0x18] sm:$0xff]
    %v43 = vld [vmem:[%s3 + $0x20] sm:$0xff]
    %v44 = vld [vmem:[%s3 + $0x28] sm:$0xff]
    %v45 = vld [vmem:[%s3 + $0x30] sm:$0xff]
    %v46 = vld [vmem:[%s3 + $0x38] sm:$0xff]
    %v47 = vld [vmem:[%s4] sm:$0x1]
    %vm48 = vcmask 523264
    %v50 = vsel %vm48, %v38, 0
    %52 = vmatpush.msra.mxu0 0.0
    %53 = vmatpush.msra.mxu0 0.0
    %54 = vmatpush.msra.mxu0 0.0
    %55 = vmatpush.msra.mxu0 0.0
    %56 = vmatpush.msra.mxu0 0.0
    %57 = vmatpush.msra.mxu0 0.0
    %58 = vmatpush.msra.mxu0 0.0
    %59 = vmatpush.msra.mxu0 0.0
    %60 = vmatpush.msra.mxu0 %v46
    %61 = vmatpush.msra.mxu0 %v45
    %62 = vmatpush.msra.mxu0 %v44
    %63 = vmatpush.msra.mxu0 %v43
    %64 = vmatpush.msra.mxu0 %v42
    %65 = vmatpush.msra.mxu0 %v41
    %66 = vmatpush.msra.mxu0 %v40
    %67 = vmatpush.msra.mxu0 %v39
    %68 = vmatmul.f32.gmra.mxu0 %v50
    %v69 = vpop.f32.mrf.mxu0
    %v70 = vadd.f32 %v47, %v69
    %71 = vdwg.mxu0
    %v72 = vmax.f32 %v70, 0.0
    %v73 = vperm.slane %v72, 0
    %v74 = vld [vmem:[%s0] sm:$0xff]
    %v75 = vld [vmem:[%s0 + $0x8] sm:$0xff]
    %v76 = vld [vmem:[%s5] sm:$0x7]
    %vm77 = vcmask 23552
    %v79 = vsel %vm77, %v74, 0
    %v82 = vsel %vm77, %v75, 0
    %vm84 = vcmask 1042432
    %v86 = vsel %vm84, %v76, 0
    %88 = vmatpush.msra.mxu0 0.0
    %89 = vmatpush.msra.mxu0 0.0
    %90 = vmatpush.msra.mxu0 0.0
    %91 = vmatpush.msra.mxu0 0.0
    %92 = vmatpush.msra.mxu0 0.0
    %93 = vmatpush.msra.mxu0 0.0
    %94 = vmatpush.msra.mxu0 0.0
    %95 = vmatpush.msra.mxu0 0.0
    %96 = vmatpush.msra.mxu0 0.0
    %97 = vmatpush.msra.mxu0 0.0
    %98 = vmatpush.msra.mxu0 0.0
    %99 = vmatpush.msra.mxu0 0.0
    %100 = vmatpush.msra.mxu0 0.0
    %101 = vmatpush.msra.mxu0 0.0
    %102 = vmatpush.msra.mxu0 0.0
    %103 = vmatpush.msra.mxu0 %v86
    %104 = vmatmul.f32.gmra.mxu0 %v79
    %v105 = vpop.f32.mrf.mxu0
    %v106 = vadd.f32 0.0, %v105
    %107 = vmatmul.f32.gmra.mxu0 %v82
    %v108 = vpop.f32.mrf.mxu0
    %v109 = vadd.f32 0.0, %v108
    %110 = vdwg.mxu0
    %v111 = vadd.f32 %v106, %v73
    %v112 = vmax.f32 %v111, 0.0
    %v114 = vrot.slane %v112, 6
    %v116 = vadd.f32 %v106, %v114
    %v117 = vmax.f32 %v116, 0.0
    %v119 = vrot.slane %v117, 6
    %v121 = vadd.f32 %v106, %v119
    %v122 = vmax.f32 %v121, 0.0
    %v124 = vrot.slane %v122, 6
    %v126 = vadd.f32 %v106, %v124
    %v127 = vmax.f32 %v126, 0.0
    %v129 = vrot.slane %v127, 6
    %v131 = vadd.f32 %v109, %v129
    %v132 = vmax.f32 %v131, 0.0
    %v134 = vrot.slane %v132, 6
    %v136 = vadd.f32 %v109, %v134
    %v137 = vmax.f32 %v136, 0.0
    %v139 = vrot.slane %v137, 6
    %v141 = vadd.f32 %v109, %v139
    %v142 = vmax.f32 %v141, 0.0
    %v144 = vrot.slane %v142, 6
    %v146 = vadd.f32 %v109, %v144
    %v147 = vmax.f32 %v146, 0.0
    %v148 = vrot.slane %v117, 2
    %149 = vrot.lane.b32.xlu0 %v148, 32
    %v150 = vpop.permute.xlu0 %149
    %v152 = vrot.slane %v122, 4
    %153 = vrot.lane.b32.xlu0 %v152, 64
    %v154 = vpop.permute.xlu0 %153
    %156 = vrot.lane.b32.xlu0 %v129, 96
    %v157 = vpop.permute.xlu0 %156
    %v159 = vrot.slane %v137, 2
    %160 = vrot.lane.b32.xlu0 %v159, 32
    %v161 = vpop.permute.xlu0 %160
    %v163 = vrot.slane %v142, 4
    %164 = vrot.lane.b32.xlu0 %v163, 64
    %v165 = vpop.permute.xlu0 %164
    %v168 = vrot.slane %v147, 6
    %169 = vrot.lane.b32.xlu0 %v168, 96
    %v170 = vpop.permute.xlu0 %169
    %vm172 = vcmask 261120
    %v173 = vsel %vm172, %v112, %v150
    %v174 = vsel %vm48, %v173, %v154
    %vm175 = vcmask 785408
    %v176 = vsel %vm175, %v174, %v157
    %v177 = vsel %vm172, %v132, %v161
    %v178 = vsel %vm48, %v177, %v165
    %v179 = vsel %vm175, %v178, %v170
    %v182 = vrot.slane %v179, 6
    %vm183 = vcmask 1041408
    %v184 = vsel %vm183, %v176, %v182
    %186 = vst [vmem:[#allocation4] sm:$0xf] %v184
    %v187 = vlaneseq
    %v188 = vshrl.u32 %v187, 7
    %v189 = vlaneseq
    %v190 = vand.u32 %v189, 127
    %vm191 = vcmp.eq.s32.totalorder %v188, %v190
    %v192 = vsel %vm191, 1, 0
    %v193 = vcvt.s32.f32 %v192
    %v194 = vrot.slane %v117, 1
    %v196 = vrot.slane %v122, 2
    %v198 = vrot.slane %v127, 3
    %v200 = vrot.slane %v132, 4
    %v202 = vrot.slane %v137, 5
    %v204 = vrot.slane %v147, 7
    %vm206 = vcmask 1040384
    %v207 = vsel %vm206, %v112, %v194
    %v208 = vsel %vm183, %v207, %v196
    %v209 = vsel %vm84, %v208, %v198
    %vm210 = vcmask 1043456
    %v211 = vsel %vm210, %v209, %v200
    %vm212 = vcmask 1044480
    %v213 = vsel %vm212, %v211, %v202
    %vm214 = vcmask 1045504
    %v215 = vsel %vm214, %v213, %v144
    %vm216 = vcmask 1046528
    %v217 = vsel %vm216, %v215, %v204
    %v219 = vsel %vm172, %v217, 0
    %221 = vmatpush.xpose.msra.mxu0 0.0
    %222 = vmatpush.xpose.msra.mxu0 0.0
    %223 = vmatpush.xpose.msra.mxu0 0.0
    %224 = vmatpush.xpose.msra.mxu0 0.0
    %225 = vmatpush.xpose.msra.mxu0 0.0
    %226 = vmatpush.xpose.msra.mxu0 0.0
    %227 = vmatpush.xpose.msra.mxu0 0.0
    %228 = vmatpush.xpose.msra.mxu0 0.0
    %229 = vmatpush.xpose.msra.mxu0 0.0
    %230 = vmatpush.xpose.msra.mxu0 0.0
    %231 = vmatpush.xpose.msra.mxu0 0.0
    %232 = vmatpush.xpose.msra.mxu0 0.0
    %233 = vmatpush.xpose.msra.mxu0 0.0
    %234 = vmatpush.xpose.msra.mxu0 0.0
    %235 = vmatpush.xpose.msra.mxu0 0.0
    %236 = vmatpush.xpose.msra.mxu0 %v219
    %237 = vmatmul.f32.gmra.mxu0 %v219
    %v238 = vpop.f32.mrf.mxu0
    %v239 = vadd.f32 0.0, %v238
    %240 = vdwg.mxu0
    %v241 = vmul.f32 %v239, %v193
    %vm242 = vcmask 64512
    %v243 = vsel %vm242, %v241, 0.0
    %244 = vadd.xlane.f32.xlu0 %v243
    %v245 = vpop.xlane.xlu0 %244
    %v246 = vrot.slane %v243, 4
    %v247 = vadd.f32 %v243, %v246
    %v248 = vrot.slane %v247, 2
    %v249 = vadd.f32 %v247, %v248
    %v250 = vrot.slane %v249, 1
    %v251 = vadd.f32 %v249, %v250
    %v252 = vadd.f32 %v245, %v251
    %v253 = vmul.f32 %v239, 2.0
    %v254 = vsub.f32 %v252, %v253
    %v255 = vmax.f32 %v254, 0.0
    %v256 = vsub.f32 0.0, %v255
    %v257 = vmul.f32 %v256, 1.442695
    %v258 = vpow.pop %v257
    %259 = vst.msk [vmem:[#allocation2] sm:$0xff] %vm242, %v258
    %v260 = vrot.slane %v112, 1
    %v263 = vrot.slane %v122, 3
    %v265 = vrot.slane %v127, 4
    %v267 = vrot.slane %v132, 5
    %v269 = vrot.slane %v142, 7
    %v271 = vsel %vm206, %v260, %v148
    %v272 = vsel %vm183, %v271, %v263
    %v273 = vsel %vm84, %v272, %v265
    %v274 = vsel %vm210, %v273, %v267
    %v275 = vsel %vm212, %v274, %v139
    %v276 = vsel %vm214, %v275, %v269
    %v277 = vsel %vm216, %v276, %v147
    %v279 = vsel %vm172, %v277, 0
    %281 = vmatpush.xpose.msra.mxu0 0.0
    %282 = vmatpush.xpose.msra.mxu0 0.0
    %283 = vmatpush.xpose.msra.mxu0 0.0
    %284 = vmatpush.xpose.msra.mxu0 0.0
    %285 = vmatpush.xpose.msra.mxu0 0.0
    %286 = vmatpush.xpose.msra.mxu0 0.0
    %287 = vmatpush.xpose.msra.mxu0 0.0
    %288 = vmatpush.xpose.msra.mxu0 0.0
    %289 = vmatpush.xpose.msra.mxu0 0.0
    %290 = vmatpush.xpose.msra.mxu0 0.0
    %291 = vmatpush.xpose.msra.mxu0 0.0
    %292 = vmatpush.xpose.msra.mxu0 0.0
    %293 = vmatpush.xpose.msra.mxu0 0.0
    %294 = vmatpush.xpose.msra.mxu0 0.0
    %295 = vmatpush.xpose.msra.mxu0 0.0
    %296 = vmatpush.xpose.msra.mxu0 %v279
    %297 = vmatmul.f32.gmra.mxu0 %v279
    %v298 = vpop.f32.mrf.mxu0
    %v299 = vadd.f32 0.0, %v298
    %300 = vdwg.mxu0
    %v301 = vmul.f32 %v299, %v193
    %v302 = vsel %vm242, %v301, 0.0
    %303 = vadd.xlane.f32.xlu0 %v302
    %v304 = vpop.xlane.xlu0 %303
    %v305 = vrot.slane %v302, 4
    %v306 = vadd.f32 %v302, %v305
    %v307 = vrot.slane %v306, 2
    %v308 = vadd.f32 %v306, %v307
    %v309 = vrot.slane %v308, 1
    %v310 = vadd.f32 %v308, %v309
    %v311 = vadd.f32 %v304, %v310
    %v312 = vmul.f32 %v299, 2.0
    %v313 = vsub.f32 %v311, %v312
    %v314 = vmax.f32 %v313, 0.0
    %v315 = vsub.f32 0.0, %v314
    %v316 = vmul.f32 %v315, 1.442695
    %v317 = vpow.pop %v316
    %s318 = scalar_lea.vmem [#allocation2], 8
    %319 = vst.msk [vmem:[%s318] sm:$0xff] %vm242, %v317
    // Predicated region
    $region26: #{tpu_custom_call.1} parent=1 // pred_check
      _
    $region27: #{tpu_custom_call.1} parent=1 // pred_check_branch
      %321 = sbr.rel (0) target = $region29
    $region28: #{tpu_custom_call.1} parent=1 // pred_region
      %323 = vsyncadd [#allocation3], 0
      %s324 = sshll.u32 [#allocation2], 4
      %s325 = int_to_ptr.vmem [resolvable:$true] %s324
      %s326 = sshll.u32 %s6, 4
      %s327 = int_to_ptr.hbm [resolvable:$true] %s326
      %332 = dma.vmem_to_hbm [thread:$0]  %s325, 256, %s327, [#allocation3], 128, 128, 8
    $region29: #{tpu_custom_call.1} parent=1 // pred_fallthru
      _
    // Predicated region
    $region30: #{tpu_custom_call.1} parent=1 // pred_check
      _
    $region31: #{tpu_custom_call.1} parent=1 // pred_check_branch
      %334 = sbr.rel (0) target = $region33
    $region32: #{tpu_custom_call.1} parent=1 // pred_region
      %336 = vsyncadd [#allocation5], 0
      %s338 = sshll.u32 [#allocation4], 4
      %s339 = int_to_ptr.vmem [resolvable:$true] %s338
      %s340 = sshll.u32 %s7, 4
      %s341 = int_to_ptr.hbm [resolvable:$true] %s340
      %343 = dma.vmem_to_hbm [thread:$0]  %s339, 64, %s341, [#allocation5]
    $region33: #{tpu_custom_call.1} parent=1 // pred_fallthru
      _
    // Predicated region
    $region34: #{tpu_custom_call.1} parent=1 // pred_check
      _
    $region35: #{tpu_custom_call.1} parent=1 // pred_check_branch
      %345 = sbr.rel (0) target = $region37
    $region36: #{tpu_custom_call.1} parent=1 // pred_region
      %347 = dma.done [#allocation3], 256
    $region37: #{tpu_custom_call.1} parent=1 // pred_fallthru
      _
    // Predicated region
    $region38: #{tpu_custom_call.1} parent=1 // pred_check
      _
    $region39: #{tpu_custom_call.1} parent=1 // pred_check_branch
      %349 = sbr.rel (0) target = $region41
    $region40: #{tpu_custom_call.1} parent=1 // pred_region
      %351 = dma.done [#allocation5], 64
    $region41: #{tpu_custom_call.1} parent=1 // pred_fallthru
      _
    %352 = vsyncpa [#allocation3], 1
    %353 = vsyncpa [#allocation5], 1

</llo_original>
